<compile_context>
chip_gen: v7x
topology: tpu7x:2x2x1
jax: 0.10.0
libtpu: 0.0.40
codegen_flags: <defaults>
</compile_context>

<pallas_src>
import math
import functools

import jax
import jax.numpy as jnp
from jax.experimental import pallas as pl
from jax.experimental.pallas import tpu as pltpu


def _round_up(x, m):
    return ((x + m - 1) // m) * m


def _pad2(a, rows, cols):
    return jnp.pad(a, ((0, rows - a.shape[0]), (0, cols - a.shape[1])))


def _layernorm_padded(x, gamma, beta, count, eps=1e-5):
    """LayerNorm over a zero-padded last axis.

    Padded lanes of `x` are exactly 0, so sums over the padded axis divided by
    the *real* width `count` give the exact mean / E[x^2].  gamma/beta are zero
    in padded lanes so padded outputs stay 0.  Single fused reduction pass.
    """
    inv = 1.0 / count
    s = jnp.sum(x, axis=-1, keepdims=True)
    sq = jnp.sum(x * x, axis=-1, keepdims=True)
    mean = s * inv
    var = jnp.maximum(sq * inv - mean * mean, 0.0)
    return (x - mean) * jax.lax.rsqrt(var + eps) * gamma + beta


def geognn_block_kernel(d_count, h_count, last_act,
                        msg_ref, scat_ref, x_ref,
                        w1_ref, w2_ref, wg_ref,
                        slabh_ref, slabd_ref,
                        out_ref, acc_ref):
    k = pl.program_id(1)

    # --- edge-block scatter: acc += scat_blk @ msg_blk (bf16 MXU, f32 acc) ---
    @pl.when(k == 0)
    def _init():
        acc_ref[...] = jnp.zeros_like(acc_ref)

    acc_ref[...] += jnp.dot(scat_ref[...], msg_ref[...],
                            preferred_element_type=jnp.float32)

    # --- epilogue only after the last edge block for this node block ---
    @pl.when(k == pl.num_programs(1) - 1)
    def _epilogue():
        x = x_ref[...]                                   # (BN, P) f32 identity
        h = x + acc_ref[...]                             # GINE eps = 0

        # Packed (1, K) vectors (biases / LayerNorm affine params), all f32.
        sh = slabh_ref[...]                              # (8, PH)
        sd = slabd_ref[...]                              # (8, P)
        b1, ln_g, ln_b = sh[0:1], sh[1:2], sh[2:3]
        b2, n1_g, n1_b = sd[0:1], sd[1:2], sd[2:3]
        bg, n2_g, n2_b = sd[3:4], sd[4:5], sd[5:6]       # n2_* include 1/sqrt(N)

        # GINE nn: Linear(D,2D) -> LayerNorm -> ReLU -> Dropout(eval) -> Linear(2D,D)
        h1 = jnp.dot(h.astype(jnp.bfloat16), w1_ref[...],
                     preferred_element_type=jnp.float32) + b1
        h1 = jnp.maximum(_layernorm_padded(h1, ln_g, ln_b, h_count), 0.0)
        gnn = jnp.dot(h1.astype(jnp.bfloat16), w2_ref[...],
                      preferred_element_type=jnp.float32) + b2

        # norm1; pos=None -> fused = gnn_out
        fused = _layernorm_padded(gnn, n1_g, n1_b, d_count)

        # gated residual fusion: one matmul over concatenated [fused | identity]
        cat = jnp.concatenate([fused, x], axis=-1).astype(jnp.bfloat16)
        gate = jax.nn.sigmoid(jnp.dot(cat, wg_ref[...],
                                      preferred_element_type=jnp.float32) + bg)
        out = gate * fused + (1.0 - gate) * x

        # norm2 + GraphNorm (1/sqrt(N) pre-folded into n2_g / n2_b)
        out = _layernorm_padded(out, n2_g, n2_b, d_count)
        if last_act:
            out = jnp.maximum(out, 0.0)
        # Dropout in eval mode is identity.
        out_ref[...] = out


@functools.partial(jax.jit, static_argnames=("last_act",))
def geognn_block(node_hidden, edge_hidden, edge_index, params, last_act=True):
    """node_hidden: (N, D) f32, edge_hidden: (E, D) f32, edge_index: (2, E) i32."""
    N, D = node_hidden.shape
    # Original module truncates to the common edge count if they disagree.
    E = min(edge_hidden.shape[0], edge_index.shape[1])
    edge_hidden = edge_hidden[:E]
    edge_index = edge_index[:, :E]
    H = 2 * D

    P = _round_up(D, 128)                 # lane-dense feature width
    PH = _round_up(H, 128)                # lane-dense hidden width
    BN = min(256, _round_up(N, 8))        # node block (MXU M dim on v6e/v7x)
    N_pad = _round_up(N, BN)
    E_pad0 = _round_up(max(E, 1), 128)
    BE = min(512, E_pad0)                 # edge block (reduction tile)
    E_pad = _round_up(E_pad0, BE)

    src, dst = edge_index[0], edge_index[1]

    # --- messages precomputed ONCE in the wrapper (f32 math, bf16 to kernel) ---
    x_src = jnp.take(node_hidden, src, axis=0)                    # (E, D) f32
    msg = jnp.maximum(x_src + edge_hidden, 0.0)                   # relu(x_src + e)
    msg_p = _pad2(msg, E_pad, P).astype(jnp.bfloat16)             # (E_pad, P) bf16

    # Identity node features, zero-padded, kept f32 for the gating math.
    x_p = _pad2(node_hidden.astype(jnp.float32), N_pad, P)

    # Scatter one-hot (N_pad, E_pad) built directly in bf16 (exact 0/1 values).
    # Padded edges get dst = -1 -> all-zero column.
    if E_pad > E:
        dst = jnp.concatenate([dst, jnp.full((E_pad - E,), -1, dst.dtype)])
    row_ids = jax.lax.broadcasted_iota(jnp.int32, (N_pad, E_pad), 0)
    scat = (row_ids == dst[None, :].astype(jnp.int32)).astype(jnp.bfloat16)

    # Weights -> bf16, zero-padded (padded rows/cols contribute exact zeros).
    w1_p = _pad2(params["w1"], P, PH).astype(jnp.bfloat16)
    w2_p = _pad2(params["w2"], PH, P).astype(jnp.bfloat16)
    wg = jnp.zeros((2 * P, P), jnp.float32)
    wg = wg.at[:D, :D].set(params["wg_f"])
    wg = wg.at[P:P + D, :D].set(params["wg_i"])
    wg_p = wg.astype(jnp.bfloat16)

    # Pack all (1, K) vectors into two f32 slabs (fewer tiny DMAs / buffers).
    inv_sqrt_n = 1.0 / math.sqrt(N)       # GraphNorm folded into norm2 affine.
    slab_h = jnp.zeros((8, PH), jnp.float32)
    slab_h = slab_h.at[0, :H].set(params["b1"].reshape(-1))
    slab_h = slab_h.at[1, :H].set(params["ln_g"].reshape(-1))
    slab_h = slab_h.at[2, :H].set(params["ln_b"].reshape(-1))
    slab_d = jnp.zeros((8, P), jnp.float32)
    slab_d = slab_d.at[0, :D].set(params["b2"].reshape(-1))
    slab_d = slab_d.at[1, :D].set(params["n1_g"].reshape(-1))
    slab_d = slab_d.at[2, :D].set(params["n1_b"].reshape(-1))
    slab_d = slab_d.at[3, :D].set(params["bg"].reshape(-1))
    slab_d = slab_d.at[4, :D].set(params["n2_g"].reshape(-1) * inv_sqrt_n)
    slab_d = slab_d.at[5, :D].set(params["n2_b"].reshape(-1) * inv_sqrt_n)

    kernel = functools.partial(geognn_block_kernel,
                               float(D), float(H), bool(last_act))

    # index maps: grid = (node_blocks i, edge_blocks k); edge axis is reduction.
    full = lambda i, k: (0, 0)            # grid-invariant operands
    node_blk = lambda i, k: (i, 0)        # per node block
    msg_blk = lambda i, k: (k, 0)         # per edge block
    scat_blk = lambda i, k: (i, k)        # per (node, edge) tile

    one_buf = pl.Buffered(1)              # single-buffer grid-invariant inputs

    # VMEM footprint (bytes) of all pipeline buffers + scratch, with 2x margin.
    vmem_need = (2 * BE * P * 2            # msg (double-buffered bf16)
                 + 2 * BN * BE * 2         # scat
                 + 2 * BN * P * 4          # x (f32)
                 + (P * PH + PH * P + 2 * P * P) * 2   # weights (single-buffered)
                 + (8 * PH + 8 * P) * 4    # slabs
                 + BN * P * 4              # acc scratch
                 + 2 * BN * P * 4)         # out
    vmem_limit = int(min(max(2 * vmem_need, 16 * 1024 * 1024), 48 * 1024 * 1024))

    out = pl.pallas_call(
        kernel,
        out_shape=jax.ShapeDtypeStruct((N_pad, P), jnp.float32),
        grid=(N_pad // BN, E_pad // BE),
        in_specs=[
            pl.BlockSpec((BE, P), msg_blk),                          # messages (bf16)
            pl.BlockSpec((BN, BE), scat_blk),                        # scatter one-hot (bf16)
            pl.BlockSpec((BN, P), node_blk),                         # identity block (f32)
            pl.BlockSpec((P, PH), full, pipeline_mode=one_buf),      # w1 (bf16)
            pl.BlockSpec((PH, P), full, pipeline_mode=one_buf),      # w2 (bf16)
            pl.BlockSpec((2 * P, P), full, pipeline_mode=one_buf),   # gate weight (bf16)
            pl.BlockSpec((8, PH), full, pipeline_mode=one_buf),      # hidden-width slab
            pl.BlockSpec((8, P), full, pipeline_mode=one_buf),       # feature-width slab
        ],
        out_specs=pl.BlockSpec((BN, P), node_blk),
        scratch_shapes=[pltpu.VMEM((BN, P), jnp.float32)],           # aggregation acc
        compiler_params=pltpu.CompilerParams(
            dimension_semantics=("parallel", "arbitrary"),
            vmem_limit_bytes=vmem_limit),
    )(msg_p, scat, x_p, w1_p, w2_p, wg_p, slab_h, slab_d)

    return out[:N, :D]


def geognn_block_reference(node_hidden, edge_hidden, edge_index, params, last_act=True):
    """Pure-JAX f32 reference implementing the original module semantics."""
    N, D = node_hidden.shape
    src, dst = edge_index[0], edge_index[1]

    def ln(v, g, b, eps=1e-5):
        m = jnp.mean(v, axis=-1, keepdims=True)
        var = jnp.mean(jnp.square(v - m), axis=-1, keepdims=True)
        return (v - m) * jax.lax.rsqrt(var + eps) * g + b

    x = node_hidden
    msg = jnp.maximum(x[src] + edge_hidden, 0.0)
    aggr = jnp.zeros_like(x).at[dst].add(msg)
    h = x + aggr
    h1 = h @ params["w1"] + params["b1"]
    h1 = jnp.maximum(ln(h1, params["ln_g"], params["ln_b"]), 0.0)
    gnn = h1 @ params["w2"] + params["b2"]
    fused = ln(gnn, params["n1_g"], params["n1_b"])
    gate = jax.nn.sigmoid(fused @ params["wg_f"] + x @ params["wg_i"] + params["bg"])
    out = gate * fused + (1.0 - gate) * x
    out = ln(out, params["n2_g"], params["n2_b"]) / jnp.sqrt(float(N))
    if last_act:
        out = jnp.maximum(out, 0.0)
    return out


if __name__ == "__main__":
    key = jax.random.PRNGKey(0)
    N, E, D = 16, 48, 32   # embed_dim = 32

    keys = jax.random.split(key, 16)
    node_hidden = jax.random.normal(keys[0], (N, D), jnp.float32)
    edge_hidden = jax.random.normal(keys[1], (E, D), jnp.float32)
    src = jax.random.randint(keys[2], (E,), 0, N)
    dst = jax.random.randint(keys[3], (E,), 0, N)
    edge_index = jnp.stack([src, dst]).astype(jnp.int32)

    def w(k, shape, scale=0.05):
        return scale * jax.random.normal(k, shape, jnp.float32)

    params = dict(
        # GINE nn
        w1=w(keys[4], (D, 2 * D)), b1=w(keys[8], (1, 2 * D), 0.02),
        ln_g=1.0 + w(keys[9], (1, 2 * D), 0.02), ln_b=w(keys[10], (1, 2 * D), 0.02),
        w2=w(keys[5], (2 * D, D)), b2=w(keys[11], (1, D), 0.02),
        # norm1
        n1_g=1.0 + w(keys[12], (1, D), 0.02), n1_b=w(keys[13], (1, D), 0.02),
        # gate Linear(2D, D) split across [fused | identity]
        wg_f=w(keys[6], (D, D)), wg_i=w(keys[7], (D, D)),
        bg=w(keys[14], (1, D), 0.02),
        # norm2
        n2_g=1.0 + w(keys[15], (1, D), 0.02), n2_b=jnp.zeros((1, D), jnp.float32),
    )

    out = geognn_block(node_hidden, edge_hidden, edge_index, params, last_act=True)
    jax.block_until_ready(out)
    assert out.shape == (N, D) and out.dtype == jnp.float32

    ref = geognn_block_reference(node_hidden, edge_hidden, edge_index, params, last_act=True)
    err = float(jnp.max(jnp.abs(out - ref)))
    assert err < 5e-2, f"max abs error vs reference too large: {err}"
    print("KERNEL_OK")
</pallas_src>

<mosaic_0001>
module attributes {stable_mosaic.version = 11 : i64} {
  func.func @geognn_block_kernel(%arg0: i32, %arg1: i32, %arg2: memref<128x128xbf16, #tpu.memory_space<vmem>>, %arg3: memref<16x128xbf16, #tpu.memory_space<vmem>>, %arg4: memref<16x128xf32, #tpu.memory_space<vmem>>, %arg5: memref<128x128xbf16, #tpu.memory_space<vmem>>, %arg6: memref<128x128xbf16, #tpu.memory_space<vmem>>, %arg7: memref<256x128xbf16, #tpu.memory_space<vmem>>, %arg8: memref<8x128xf32, #tpu.memory_space<vmem>>, %arg9: memref<8x128xf32, #tpu.memory_space<vmem>>, %arg10: memref<16x128xf32, #tpu.memory_space<vmem>>, %arg11: memref<16x128xf32, #tpu.memory_space<vmem>>) attributes {dimension_semantics = [#tpu.dimension_semantics<parallel>, #tpu.dimension_semantics<arbitrary>], iteration_bounds = array<i64: 1, 1>, scalar_prefetch = 0 : i64, scratch_operands = 1 : i64, tpu.core_type = #tpu.core_type<tc>, window_params = [{transform_indices = @transform_0, window_bounds = array<i64: 128, 128>}, {transform_indices = @transform_1, window_bounds = array<i64: 16, 128>}, {transform_indices = @transform_2, window_bounds = array<i64: 16, 128>}, {pipeline_mode = #tpu.pipeline_mode<synchronous>, transform_indices = @transform_3, window_bounds = array<i64: 128, 128>}, {pipeline_mode = #tpu.pipeline_mode<synchronous>, transform_indices = @transform_4, window_bounds = array<i64: 128, 128>}, {pipeline_mode = #tpu.pipeline_mode<synchronous>, transform_indices = @transform_5, window_bounds = array<i64: 256, 128>}, {pipeline_mode = #tpu.pipeline_mode<synchronous>, transform_indices = @transform_6, window_bounds = array<i64: 8, 128>}, {pipeline_mode = #tpu.pipeline_mode<synchronous>, transform_indices = @transform_7, window_bounds = array<i64: 8, 128>}, {transform_indices = @transform_8, window_bounds = array<i64: 16, 128>}]} {
    %c0_i32 = arith.constant 0 : i32
    %0 = arith.cmpi eq, %arg1, %c0_i32 : i32
    %1 = arith.extui %0 : i1 to i32
    %c0_i32_0 = arith.constant 0 : i32
    %2 = arith.cmpi ne, %1, %c0_i32_0 : i32
    scf.if %2 {
      %cst_10 = arith.constant 0.000000e+00 : f32
      %12 = vector.broadcast %cst_10 : f32 to vector<16x128xf32>
      %c0_11 = arith.constant 0 : index
      %c0_12 = arith.constant 0 : index
      %13 = vector.load %arg11[%c0_11, %c0_12] : memref<16x128xf32, #tpu.memory_space<vmem>>, vector<16x128xf32>
      tpu.vector_store %arg11[%c0_11, %c0_12], %12 {strides = array<i32>} : memref<16x128xf32, #tpu.memory_space<vmem>>, vector<16x128xf32>,
    } else {
    }
    %c0 = arith.constant 0 : index
    %c0_1 = arith.constant 0 : index
    %3 = vector.load %arg11[%c0, %c0_1] : memref<16x128xf32, #tpu.memory_space<vmem>>, vector<16x128xf32>
    %c0_2 = arith.constant 0 : index
    %c0_3 = arith.constant 0 : index
    %4 = vector.load %arg3[%c0_2, %c0_3] : memref<16x128xbf16, #tpu.memory_space<vmem>>, vector<16x128xbf16>
    %c0_4 = arith.constant 0 : index
    %c0_5 = arith.constant 0 : index
    %5 = vector.load %arg2[%c0_4, %c0_5] : memref<128x128xbf16, #tpu.memory_space<vmem>>, vector<128x128xbf16>
    %cst = arith.constant dense<0.000000e+00> : vector<16x128xf32>
    %6 = tpu.matmul %4, %5, %cst {dimension_numbers = #tpu.dot_dimension_numbers<[1], [0], [0], [1], [0, 0, 1, 1], [], []>} : vector<16x128xbf16>, vector<128x128xbf16>, vector<16x128xf32> -> vector<16x128xf32>
    %7 = arith.addf %3, %6 : vector<16x128xf32>
    %c0_6 = arith.constant 0 : index
    %c0_7 = arith.constant 0 : index
    %8 = vector.load %arg11[%c0_6, %c0_7] : memref<16x128xf32, #tpu.memory_space<vmem>>, vector<16x128xf32>
    tpu.vector_store %arg11[%c0_6, %c0_7], %7 {strides = array<i32>} : memref<16x128xf32, #tpu.memory_space<vmem>>, vector<16x128xf32>,
    %c0_i32_8 = arith.constant 0 : i32
    %9 = arith.cmpi eq, %arg1, %c0_i32_8 : i32
    %10 = arith.extui %9 : i1 to i32
    %c0_i32_9 = arith.constant 0 : i32
    %11 = arith.cmpi ne, %10, %c0_i32_9 : i32
    scf.if %11 {
      %c0_10 = arith.constant 0 : index
      %c0_11 = arith.constant 0 : index
      %12 = vector.load %arg4[%c0_10, %c0_11] : memref<16x128xf32, #tpu.memory_space<vmem>>, vector<16x128xf32>
      %c0_12 = arith.constant 0 : index
      %c0_13 = arith.constant 0 : index
      %13 = vector.load %arg11[%c0_12, %c0_13] : memref<16x128xf32, #tpu.memory_space<vmem>>, vector<16x128xf32>
      %14 = arith.addf %12, %13 : vector<16x128xf32>
      %c0_14 = arith.constant 0 : index
      %c0_15 = arith.constant 0 : index
      %15 = vector.load %arg8[%c0_14, %c0_15] : memref<8x128xf32, #tpu.memory_space<vmem>>, vector<8x128xf32>
      %c0_16 = arith.constant 0 : index
      %c0_17 = arith.constant 0 : index
      %16 = vector.load %arg9[%c0_16, %c0_17] : memref<8x128xf32, #tpu.memory_space<vmem>>, vector<8x128xf32>
      %17 = vector.extract_strided_slice %15 {offsets = [0, 0], sizes = [1, 128], strides = [1, 1]} : vector<8x128xf32> to vector<1x128xf32>
      %18 = vector.extract_strided_slice %15 {offsets = [1, 0], sizes = [1, 128], strides = [1, 1]} : vector<8x128xf32> to vector<1x128xf32>
      %19 = vector.extract_strided_slice %15 {offsets = [2, 0], sizes = [1, 128], strides = [1, 1]} : vector<8x128xf32> to vector<1x128xf32>
      %20 = vector.extract_strided_slice %16 {offsets = [0, 0], sizes = [1, 128], strides = [1, 1]} : vector<8x128xf32> to vector<1x128xf32>
      %21 = vector.extract_strided_slice %16 {offsets = [1, 0], sizes = [1, 128], strides = [1, 1]} : vector<8x128xf32> to vector<1x128xf32>
      %22 = vector.extract_strided_slice %16 {offsets = [2, 0], sizes = [1, 128], strides = [1, 1]} : vector<8x128xf32> to vector<1x128xf32>
      %23 = vector.extract_strided_slice %16 {offsets = [3, 0], sizes = [1, 128], strides = [1, 1]} : vector<8x128xf32> to vector<1x128xf32>
      %24 = vector.extract_strided_slice %16 {offsets = [4, 0], sizes = [1, 128], strides = [1, 1]} : vector<8x128xf32> to vector<1x128xf32>
      %25 = vector.extract_strided_slice %16 {offsets = [5, 0], sizes = [1, 128], strides = [1, 1]} : vector<8x128xf32> to vector<1x128xf32>
      %26 = arith.truncf %14 : vector<16x128xf32> to vector<16x128xbf16>
      %c0_18 = arith.constant 0 : index
      %c0_19 = arith.constant 0 : index
      %27 = vector.load %arg5[%c0_18, %c0_19] : memref<128x128xbf16, #tpu.memory_space<vmem>>, vector<128x128xbf16>
      %cst_20 = arith.constant dense<0.000000e+00> : vector<16x128xf32>
      %28 = tpu.matmul %26, %27, %cst_20 {dimension_numbers = #tpu.dot_dimension_numbers<[1], [0], [0], [1], [0, 0, 1, 1], [], []>} : vector<16x128xbf16>, vector<128x128xbf16>, vector<16x128xf32> -> vector<16x128xf32>
      %29 = vector.broadcast %17 : vector<1x128xf32> to vector<16x128xf32>
      %30 = arith.addf %28, %29 : vector<16x128xf32>
      %cst_21 = arith.constant dense<0.000000e+00> : vector<16xf32>
      %31 = vector.multi_reduction <add>, %30, %cst_21 [1] : vector<16x128xf32> to vector<16xf32>
      %32 = vector.shape_cast %31 : vector<16xf32> to vector<16x1xf32>
      %33 = arith.mulf %30, %30 : vector<16x128xf32>
      %cst_22 = arith.constant dense<0.000000e+00> : vector<16xf32>
      %34 = vector.multi_reduction <add>, %33, %cst_22 [1] : vector<16x128xf32> to vector<16xf32>
      %35 = vector.shape_cast %34 : vector<16xf32> to vector<16x1xf32>
      %cst_23 = arith.constant 1.562500e-02 : f32
      %36 = vector.broadcast %cst_23 : f32 to vector<16x1xf32>
      %37 = arith.mulf %32, %36 : vector<16x1xf32>
      %cst_24 = arith.constant 1.562500e-02 : f32
      %38 = vector.broadcast %cst_24 : f32 to vector<16x1xf32>
      %39 = arith.mulf %35, %38 : vector<16x1xf32>
      %40 = arith.mulf %37, %37 : vector<16x1xf32>
      %41 = arith.subf %39, %40 : vector<16x1xf32>
      %cst_25 = arith.constant 0.000000e+00 : f32
      %42 = vector.broadcast %cst_25 : f32 to vector<16x1xf32>
      %43 = arith.maximumf %41, %42 : vector<16x1xf32>
      %44 = vector.broadcast %37 : vector<16x1xf32> to vector<16x128xf32>
      %45 = arith.subf %30, %44 : vector<16x128xf32>
      %cst_26 = arith.constant 9.99999974E-6 : f32
      %46 = vector.broadcast %cst_26 : f32 to vector<16x1xf32>
      %47 = arith.addf %43, %46 : vector<16x1xf32>
      %48 = math.rsqrt %47 : vector<16x1xf32>
      %49 = vector.broadcast %48 : vector<16x1xf32> to vector<16x128xf32>
      %50 = arith.mulf %45, %49 : vector<16x128xf32>
      %51 = vector.broadcast %18 : vector<1x128xf32> to vector<16x128xf32>
      %52 = arith.mulf %50, %51 : vector<16x128xf32>
      %53 = vector.broadcast %19 : vector<1x128xf32> to vector<16x128xf32>
      %54 = arith.addf %52, %53 : vector<16x128xf32>
      %cst_27 = arith.constant 0.000000e+00 : f32
      %55 = vector.broadcast %cst_27 : f32 to vector<16x128xf32>
      %56 = arith.maximumf %54, %55 : vector<16x128xf32>
      %57 = arith.truncf %56 : vector<16x128xf32> to vector<16x128xbf16>
      %c0_28 = arith.constant 0 : index
      %c0_29 = arith.constant 0 : index
      %58 = vector.load %arg6[%c0_28, %c0_29] : memref<128x128xbf16, #tpu.memory_space<vmem>>, vector<128x128xbf16>
      %cst_30 = arith.constant dense<0.000000e+00> : vector<16x128xf32>
      %59 = tpu.matmul %57, %58, %cst_30 {dimension_numbers = #tpu.dot_dimension_numbers<[1], [0], [0], [1], [0, 0, 1, 1], [], []>} : vector<16x128xbf16>, vector<128x128xbf16>, vector<16x128xf32> -> vector<16x128xf32>
      %60 = vector.broadcast %20 : vector<1x128xf32> to vector<16x128xf32>
      %61 = arith.addf %59, %60 : vector<16x128xf32>
      %cst_31 = arith.constant dense<0.000000e+00> : vector<16xf32>
      %62 = vector.multi_reduction <add>, %61, %cst_31 [1] : vector<16x128xf32> to vector<16xf32>
      %63 = vector.shape_cast %62 : vector<16xf32> to vector<16x1xf32>
      %64 = arith.mulf %61, %61 : vector<16x128xf32>
      %cst_32 = arith.constant dense<0.000000e+00> : vector<16xf32>
      %65 = vector.multi_reduction <add>, %64, %cst_32 [1] : vector<16x128xf32> to vector<16xf32>
      %66 = vector.shape_cast %65 : vector<16xf32> to vector<16x1xf32>
      %cst_33 = arith.constant 3.125000e-02 : f32
      %67 = vector.broadcast %cst_33 : f32 to vector<16x1xf32>
      %68 = arith.mulf %63, %67 : vector<16x1xf32>
      %cst_34 = arith.constant 3.125000e-02 : f32
      %69 = vector.broadcast %cst_34 : f32 to vector<16x1xf32>
      %70 = arith.mulf %66, %69 : vector<16x1xf32>
      %71 = arith.mulf %68, %68 : vector<16x1xf32>
      %72 = arith.subf %70, %71 : vector<16x1xf32>
      %cst_35 = arith.constant 0.000000e+00 : f32
      %73 = vector.broadcast %cst_35 : f32 to vector<16x1xf32>
      %74 = arith.maximumf %72, %73 : vector<16x1xf32>
      %75 = vector.broadcast %68 : vector<16x1xf32> to vector<16x128xf32>
      %76 = arith.subf %61, %75 : vector<16x128xf32>
      %cst_36 = arith.constant 9.99999974E-6 : f32
      %77 = vector.broadcast %cst_36 : f32 to vector<16x1xf32>
      %78 = arith.addf %74, %77 : vector<16x1xf32>
      %79 = math.rsqrt %78 : vector<16x1xf32>
      %80 = vector.broadcast %79 : vector<16x1xf32> to vector<16x128xf32>
      %81 = arith.mulf %76, %80 : vector<16x128xf32>
      %82 = vector.broadcast %21 : vector<1x128xf32> to vector<16x128xf32>
      %83 = arith.mulf %81, %82 : vector<16x128xf32>
      %84 = vector.broadcast %22 : vector<1x128xf32> to vector<16x128xf32>
      %85 = arith.addf %83, %84 : vector<16x128xf32>
      %86 = tpu.concatenate %85, %12 in 1 : vector<16x128xf32>, vector<16x128xf32> -> vector<16x256xf32>
      %87 = arith.truncf %86 : vector<16x256xf32> to vector<16x256xbf16>
      %c0_37 = arith.constant 0 : index
      %c0_38 = arith.constant 0 : index
      %88 = vector.load %arg7[%c0_37, %c0_38] : memref<256x128xbf16, #tpu.memory_space<vmem>>, vector<256x128xbf16>
      %cst_39 = arith.constant dense<0.000000e+00> : vector<16x128xf32>
      %89 = tpu.matmul %87, %88, %cst_39 {dimension_numbers = #tpu.dot_dimension_numbers<[1], [0], [0], [1], [0, 0, 1, 1], [], []>} : vector<16x256xbf16>, vector<256x128xbf16>, vector<16x128xf32> -> vector<16x128xf32>
      %90 = vector.broadcast %23 : vector<1x128xf32> to vector<16x128xf32>
      %91 = arith.addf %89, %90 : vector<16x128xf32>
      %92 = arith.negf %91 : vector<16x128xf32>
      %93 = math.exp %92 : vector<16x128xf32>
      %cst_40 = arith.constant 1.000000e+00 : f32
      %94 = vector.broadcast %cst_40 : f32 to vector<16x128xf32>
      %95 = arith.addf %94, %93 : vector<16x128xf32>
      %96 = arith.divf %94, %95 : vector<16x128xf32>
      %97 = arith.mulf %96, %85 : vector<16x128xf32>
      %cst_41 = arith.constant 1.000000e+00 : f32
      %98 = vector.broadcast %cst_41 : f32 to vector<16x128xf32>
      %99 = arith.subf %98, %96 : vector<16x128xf32>
      %100 = arith.mulf %99, %12 : vector<16x128xf32>
      %101 = arith.addf %97, %100 : vector<16x128xf32>
      %cst_42 = arith.constant dense<0.000000e+00> : vector<16xf32>
      %102 = vector.multi_reduction <add>, %101, %cst_42 [1] : vector<16x128xf32> to vector<16xf32>
      %103 = vector.shape_cast %102 : vector<16xf32> to vector<16x1xf32>
      %104 = arith.mulf %101, %101 : vector<16x128xf32>
      %cst_43 = arith.constant dense<0.000000e+00> : vector<16xf32>
      %105 = vector.multi_reduction <add>, %104, %cst_43 [1] : vector<16x128xf32> to vector<16xf32>
      %106 = vector.shape_cast %105 : vector<16xf32> to vector<16x1xf32>
      %cst_44 = arith.constant 3.125000e-02 : f32
      %107 = vector.broadcast %cst_44 : f32 to vector<16x1xf32>
      %108 = arith.mulf %103, %107 : vector<16x1xf32>
      %cst_45 = arith.constant 3.125000e-02 : f32
      %109 = vector.broadcast %cst_45 : f32 to vector<16x1xf32>
      %110 = arith.mulf %106, %109 : vector<16x1xf32>
      %111 = arith.mulf %108, %108 : vector<16x1xf32>
      %112 = arith.subf %110, %111 : vector<16x1xf32>
      %cst_46 = arith.constant 0.000000e+00 : f32
      %113 = vector.broadcast %cst_46 : f32 to vector<16x1xf32>
      %114 = arith.maximumf %112, %113 : vector<16x1xf32>
      %115 = vector.broadcast %108 : vector<16x1xf32> to vector<16x128xf32>
      %116 = arith.subf %101, %115 : vector<16x128xf32>
      %cst_47 = arith.constant 9.99999974E-6 : f32
      %117 = vector.broadcast %cst_47 : f32 to vector<16x1xf32>
      %118 = arith.addf %114, %117 : vector<16x1xf32>
      %119 = math.rsqrt %118 : vector<16x1xf32>
      %120 = vector.broadcast %119 : vector<16x1xf32> to vector<16x128xf32>
      %121 = arith.mulf %116, %120 : vector<16x128xf32>
      %122 = vector.broadcast %24 : vector<1x128xf32> to vector<16x128xf32>
      %123 = arith.mulf %121, %122 : vector<16x128xf32>
      %124 = vector.broadcast %25 : vector<1x128xf32> to vector<16x128xf32>
      %125 = arith.addf %123, %124 : vector<16x128xf32>
      %cst_48 = arith.constant 0.000000e+00 : f32
      %126 = vector.broadcast %cst_48 : f32 to vector<16x128xf32>
      %127 = arith.maximumf %125, %126 : vector<16x128xf32>
      %c0_49 = arith.constant 0 : index
      %c0_50 = arith.constant 0 : index
      %128 = vector.load %arg10[%c0_49, %c0_50] : memref<16x128xf32, #tpu.memory_space<vmem>>, vector<16x128xf32>
      tpu.vector_store %arg10[%c0_49, %c0_50], %127 {strides = array<i32>} : memref<16x128xf32, #tpu.memory_space<vmem>>, vector<16x128xf32>,
    } else {
    }
    return
  }
  func.func @transform_0(%arg0: i32, %arg1: i32) -> (i32, i32) {
    %c0_i32 = arith.constant 0 : i32
    %c0_i32_0 = arith.constant 0 : i32
    return %arg1, %c0_i32 : i32, i32
  }
  func.func @transform_1(%arg0: i32, %arg1: i32) -> (i32, i32) {
    %c0_i32 = arith.constant 0 : i32
    return %arg0, %arg1 : i32, i32
  }
  func.func @transform_2(%arg0: i32, %arg1: i32) -> (i32, i32) {
    %c0_i32 = arith.constant 0 : i32
    %c0_i32_0 = arith.constant 0 : i32
    return %arg0, %c0_i32 : i32, i32
  }
  func.func @transform_3(%arg0: i32, %arg1: i32) -> (i32, i32) {
    %c0_i32 = arith.constant 0 : i32
    %c0_i32_0 = arith.constant 0 : i32
    %c0_i32_1 = arith.constant 0 : i32
    return %c0_i32, %c0_i32_0 : i32, i32
  }
  func.func @transform_4(%arg0: i32, %arg1: i32) -> (i32, i32) {
    %c0_i32 = arith.constant 0 : i32
    %c0_i32_0 = arith.constant 0 : i32
    %c0_i32_1 = arith.constant 0 : i32
    return %c0_i32, %c0_i32_0 : i32, i32
  }
  func.func @transform_5(%arg0: i32, %arg1: i32) -> (i32, i32) {
    %c0_i32 = arith.constant 0 : i32
    %c0_i32_0 = arith.constant 0 : i32
    %c0_i32_1 = arith.constant 0 : i32
    return %c0_i32, %c0_i32_0 : i32, i32
  }
  func.func @transform_6(%arg0: i32, %arg1: i32) -> (i32, i32) {
    %c0_i32 = arith.constant 0 : i32
    %c0_i32_0 = arith.constant 0 : i32
    %c0_i32_1 = arith.constant 0 : i32
    return %c0_i32, %c0_i32_0 : i32, i32
  }
  func.func @transform_7(%arg0: i32, %arg1: i32) -> (i32, i32) {
    %c0_i32 = arith.constant 0 : i32
    %c0_i32_0 = arith.constant 0 : i32
    %c0_i32_1 = arith.constant 0 : i32
    return %c0_i32, %c0_i32_0 : i32, i32
  }
  func.func @transform_8(%arg0: i32, %arg1: i32) -> (i32, i32) {
    %c0_i32 = arith.constant 0 : i32
    %c0_i32_0 = arith.constant 0 : i32
    return %arg0, %c0_i32 : i32, i32
  }
}

</mosaic_0001>

<llo_original>
// kernel: geognn_block.1
$region0: #{geognn_block.1}
  #allocation0 [shape = 'u32[]', space=smem, size = 0x4, offset = 0x4, fixed_abs, tag = 'smem constant byte address 0x4 - core index']
  #allocation1 [shape = 'u32[144,128]{1,0:T(1,128)}', space=vmem, size = 0x12000, scoped, tag = 'internal scratch']
  #allocation2 [shape = 'f32[16,128]{1,0:T(8,128)}', space=vmem, size = 0x2000, scoped, tag = 'scratch operand']
  %s0 = inlined_call_operand.vmem [shape: bf16[128,128], index: 0, kind: input, shape index: {}]
  %s1 = inlined_call_operand.vmem [shape: bf16[16,128], index: 1, kind: input, shape index: {}]
  %s2 = inlined_call_operand.vmem [shape: f32[16,128], index: 2, kind: input, shape index: {}]
  %s3 = inlined_call_operand.vmem [shape: bf16[128,128], index: 3, kind: input, shape index: {}]
  %s4 = inlined_call_operand.vmem [shape: bf16[128,128], index: 4, kind: input, shape index: {}]
  %s5 = inlined_call_operand.vmem [shape: bf16[256,128], index: 5, kind: input, shape index: {}]
  %s6 = inlined_call_operand.vmem [shape: f32[8,128], index: 6, kind: input, shape index: {}]
  %s7 = inlined_call_operand.vmem [shape: f32[8,128], index: 7, kind: input, shape index: {}]
  %s8 = inlined_call_operand.hbm [shape: f32[16,128], index: 8, kind: output, shape index: {}]
  %s9 = sld [smem:[#allocation0]]
  $region50: #{geognn_block.1} parent=0
    _
  %s11 = ssub.s32 1, %s9
  %s12 = scalar_select 0, %s11, %s9
  $region1: #{geognn_block.1} parent=0
    #allocation3 [shape = 'u8[8192]{0}', space=vmem, size = 0x2000, scoped, tag = 'output window, operand 0, single buffered']
    #allocation4 [shape = 's32[1]{0}', space=sflag, size = 0x4, scoped, tag = 'scoped memory for geognn_block.1']
    %13 = vsyncpa [#allocation4], 0
    // Predicated region
    $region2: #{geognn_block.1} parent=1 // pred_check
      _
    $region3: #{geognn_block.1} parent=1 // pred_check_branch
      %15 = sbr.rel (0) target = $region5
    $region4: #{geognn_block.1} parent=1 // pred_region
      _
    $region5: #{geognn_block.1} parent=1 // pred_fallthru
      _
    // Predicated region
    $region6: #{geognn_block.1} parent=1 // pred_check
      _
    $region7: #{geognn_block.1} parent=1 // pred_check_branch
      %17 = sbr.rel (0) target = $region9
    $region8: #{geognn_block.1} parent=1 // pred_region
      _
    $region9: #{geognn_block.1} parent=1 // pred_fallthru
      _
    // Predicated region
    $region10: #{geognn_block.1} parent=1 // pred_check
      _
    $region11: #{geognn_block.1} parent=1 // pred_check_branch
      %19 = sbr.rel (0) target = $region13
    $region12: #{geognn_block.1} parent=1 // pred_region
      _
    $region13: #{geognn_block.1} parent=1 // pred_fallthru
      _
    // Predicated region
    $region14: #{geognn_block.1} parent=1 // pred_check
      _
    $region15: #{geognn_block.1} parent=1 // pred_check_branch
      %21 = sbr.rel (0) target = $region17
    $region16: #{geognn_block.1} parent=1 // pred_region
      _
    $region17: #{geognn_block.1} parent=1 // pred_fallthru
      _
    // Predicated region
    $region18: #{geognn_block.1} parent=1 // pred_check
      _
    $region19: #{geognn_block.1} parent=1 // pred_check_branch
      %23 = sbr.rel (0) target = $region21
    $region20: #{geognn_block.1} parent=1 // pred_region
      _
    $region21: #{geognn_block.1} parent=1 // pred_fallthru
      _
    // Predicated region
    $region22: #{geognn_block.1} parent=1 // pred_check
      _
    $region23: #{geognn_block.1} parent=1 // pred_check_branch
      %25 = sbr.rel (0) target = $region25
    $region24: #{geognn_block.1} parent=1 // pred_region
      _
    $region25: #{geognn_block.1} parent=1 // pred_fallthru
      _
    // Predicated region
    $region26: #{geognn_block.1} parent=1 // pred_check
      _
    $region27: #{geognn_block.1} parent=1 // pred_check_branch
      %27 = sbr.rel (0) target = $region29
    $region28: #{geognn_block.1} parent=1 // pred_region
      _
    $region29: #{geognn_block.1} parent=1 // pred_fallthru
      _
    // Predicated region
    $region30: #{geognn_block.1} parent=1 // pred_check
      _
    $region31: #{geognn_block.1} parent=1 // pred_check_branch
      %29 = sbr.rel (0) target = $region33
    $region32: #{geognn_block.1} parent=1 // pred_region
      _
    $region33: #{geognn_block.1} parent=1 // pred_fallthru
      _
    %p31 = scmp.eq.s32.totalorder 0, 0
    // Predicated region
    $region34: #{geognn_block.1} parent=1 // pred_check
      %p32 = pneg %p31
    $region35: #{geognn_block.1} parent=1 // pred_check_branch
      %34 = sbr.rel (%p32) target = $region37
    $region36: #{geognn_block.1} parent=1 // pred_region
      %35 = vst [vmem:[#allocation2] sm:$0xff] 0.0
      %36 = vst [vmem:[#allocation2 + $0x8] sm:$0xff] 0.0
    $region37: #{geognn_block.1} parent=1 // pred_fallthru
      _
    %v37 = vld [vmem:[#allocation2] sm:$0xff]
    %v38 = vld [vmem:[#allocation2 + $0x8] sm:$0xff]
    %v39 = vld [vmem:[%s1] sm:$0xf]
    %v40 = vld [vmem:[%s1 + $0x4] sm:$0xf]
    %v41 = vld [vmem:[%s0] sm:$0xf]
    %v42 = vld [vmem:[%s0 + $0x4] sm:$0xf]
    %v43 = vld [vmem:[%s0 + $0x8] sm:$0xf]
    %v44 = vld [vmem:[%s0 + $0xc] sm:$0xf]
    %v45 = vld [vmem:[%s0 + $0x10] sm:$0xf]
    %v46 = vld [vmem:[%s0 + $0x14] sm:$0xf]
    %v47 = vld [vmem:[%s0 + $0x18] sm:$0xf]
    %v48 = vld [vmem:[%s0 + $0x1c] sm:$0xf]
    %v49 = vld [vmem:[%s0 + $0x20] sm:$0xf]
    %v50 = vld [vmem:[%s0 + $0x24] sm:$0xf]
    %v51 = vld [vmem:[%s0 + $0x28] sm:$0xf]
    %v52 = vld [vmem:[%s0 + $0x2c] sm:$0xf]
    %v53 = vld [vmem:[%s0 + $0x30] sm:$0xf]
    %v54 = vld [vmem:[%s0 + $0x34] sm:$0xf]
    %v55 = vld [vmem:[%s0 + $0x38] sm:$0xf]
    %v56 = vld [vmem:[%s0 + $0x3c] sm:$0xf]
    %v59 = vunpack.c.l.b16 %v39
    %v60 = vunpack.c.l.b16 %v40
    %v61 = vpack.c.b16 %v60, %v59
    %v79 = vunpack.c.l.b16 %v41
    %v80 = vunpack.c.l.b16 %v42
    %v81 = vunpack.c.l.b16 %v43
    %v82 = vunpack.c.l.b16 %v44
    %v83 = vunpack.c.l.b16 %v45
    %v84 = vunpack.c.l.b16 %v46
    %v85 = vunpack.c.l.b16 %v47
    %v86 = vunpack.c.l.b16 %v48
    %v87 = vunpack.c.l.b16 %v49
    %v88 = vunpack.c.l.b16 %v50
    %v89 = vunpack.c.l.b16 %v51
    %v90 = vunpack.c.l.b16 %v52
    %v91 = vunpack.c.l.b16 %v53
    %v92 = vunpack.c.l.b16 %v54
    %v93 = vunpack.c.l.b16 %v55
    %v94 = vunpack.c.l.b16 %v56
    %v95 = vpack.c.b16 %v80, %v79
    %v96 = vpack.c.b16 %v82, %v81
    %v97 = vpack.c.b16 %v84, %v83
    %v98 = vpack.c.b16 %v86, %v85
    %v99 = vpack.c.b16 %v88, %v87
    %v100 = vpack.c.b16 %v90, %v89
    %v101 = vpack.c.b16 %v92, %v91
    %v102 = vpack.c.b16 %v94, %v93
    %111 = vmatprep.subr.bf16.mxu0 0
    %112 = vmatpush1.bf16.msra.mxu0 %v95
    %113 = vmatprep.subr.bf16.mxu0 0
    %114 = vmatpush1.bf16.msra.mxu0 %v96
    %115 = vmatprep.subr.bf16.mxu0 0
    %116 = vmatpush1.bf16.msra.mxu0 %v97
    %117 = vmatprep.subr.bf16.mxu0 0
    %118 = vmatpush1.bf16.msra.mxu0 %v98
    %119 = vmatprep.subr.bf16.mxu0 0
    %120 = vmatpush1.bf16.msra.mxu0 %v99
    %121 = vmatprep.subr.bf16.mxu0 0
    %122 = vmatpush1.bf16.msra.mxu0 %v100
    %123 = vmatprep.subr.bf16.mxu0 0
    %124 = vmatpush1.bf16.msra.mxu0 %v101
    %125 = vmatprep.subr.bf16.mxu0 0
    %126 = vmatpush1.bf16.msra.mxu0 %v102
    %127 = vmatprep.subr.bf16.mxu0 0
    %128 = vmatpush1.bf16.msra.mxu0 0
    %129 = vmatprep.subr.bf16.mxu0 0
    %130 = vmatpush1.bf16.msra.mxu0 0
    %131 = vmatprep.subr.bf16.mxu0 0
    %132 = vmatpush1.bf16.msra.mxu0 0
    %133 = vmatprep.subr.bf16.mxu0 0
    %134 = vmatpush1.bf16.msra.mxu0 0
    %135 = vmatprep.subr.bf16.mxu0 0
    %136 = vmatpush1.bf16.msra.mxu0 0
    %137 = vmatprep.subr.bf16.mxu0 0
    %138 = vmatpush1.bf16.msra.mxu0 0
    %139 = vmatprep.subr.bf16.mxu0 0
    %140 = vmatpush1.bf16.msra.mxu0 0
    %141 = vmatprep.subr.bf16.mxu0 0
    %142 = vmatpush1.bf16.msra.mxu0 0
    %143 = vmatprep.mubr.bf16.mxu0 0
    %144 = vmatmul.mubr.bf16.gmra.mrb[0].mxu0 %v61
    %v145 = vpop.f32.mrb[0].mxu0
    %v146 = vadd.f32 0.0, %v145
    %v147 = vpop.f32.mrb[0].mxu0
    %v148 = vpop.f32.mrb[0].mxu0
    %v149 = vadd.f32 0.0, %v148
    %v150 = vpop.f32.mrb[0].mxu0
    %151 = vdwg.mxu0
    %v152 = vadd.f32 %v37, %v146
    %v153 = vadd.f32 %v38, %v149
    %154 = vst [vmem:[#allocation2] sm:$0xff] %v152
    %155 = vst [vmem:[#allocation2 + $0x8] sm:$0xff] %v153
    // Predicated region
    $region38: #{geognn_block.1} parent=1 // pred_check
      %p156 = pneg %p31
    $region39: #{geognn_block.1} parent=1 // pred_check_branch
      %158 = sbr.rel (%p156) target = $region41
    $region40: #{geognn_block.1} parent=1 // pred_region
      %v159 = vld [vmem:[%s2] sm:$0xff]
      %v160 = vld [vmem:[%s2 + $0x8] sm:$0xff]
      %v161 = vld [vmem:[#allocation2] sm:$0xff]
      %v162 = vld [vmem:[#allocation2 + $0x8] sm:$0xff]
      %v163 = vadd.f32 %v159, %v161
      %v164 = vadd.f32 %v160, %v162
      %v165 = vld [vmem:[%s6] sm:$0xff]
      %v166 = vld [vmem:[%s7] sm:$0xff]
      %v167 = vpack.c.bf16 %v164, %v163
      %v168 = vld [vmem:[%s3] sm:$0xf]
      %v169 = vld [vmem:[%s3 + $0x4] sm:$0xf]
      %v170 = vld [vmem:[%s3 + $0x8] sm:$0xf]
      %v171 = vld [vmem:[%s3 + $0xc] sm:$0xf]
      %v172 = vld [vmem:[%s3 + $0x10] sm:$0xf]
      %v173 = vld [vmem:[%s3 + $0x14] sm:$0xf]
      %v174 = vld [vmem:[%s3 + $0x18] sm:$0xf]
      %v175 = vld [vmem:[%s3 + $0x1c] sm:$0xf]
      %v176 = vld [vmem:[%s3 + $0x20] sm:$0xf]
      %v177 = vld [vmem:[%s3 + $0x24] sm:$0xf]
      %v178 = vld [vmem:[%s3 + $0x28] sm:$0xf]
      %v179 = vld [vmem:[%s3 + $0x2c] sm:$0xf]
      %v180 = vld [vmem:[%s3 + $0x30] sm:$0xf]
      %v181 = vld [vmem:[%s3 + $0x34] sm:$0xf]
      %v182 = vld [vmem:[%s3 + $0x38] sm:$0xf]
      %v183 = vld [vmem:[%s3 + $0x3c] sm:$0xf]
      %v184 = vlaneseq
      %v185 = vshrl.u32 %v184, 7
      %v186 = vsub.s32 0, %v185
      %v187 = vrot.slane %v165, %v186
      %v204 = vunpack.c.l.b16 %v168
      %v205 = vunpack.c.l.b16 %v169
      %v206 = vunpack.c.l.b16 %v170
      %v207 = vunpack.c.l.b16 %v171
      %v208 = vunpack.c.l.b16 %v172
      %v209 = vunpack.c.l.b16 %v173
      %v210 = vunpack.c.l.b16 %v174
      %v211 = vunpack.c.l.b16 %v175
      %v212 = vunpack.c.l.b16 %v176
      %v213 = vunpack.c.l.b16 %v177
      %v214 = vunpack.c.l.b16 %v178
      %v215 = vunpack.c.l.b16 %v179
      %v216 = vunpack.c.l.b16 %v180
      %v217 = vunpack.c.l.b16 %v181
      %v218 = vunpack.c.l.b16 %v182
      %v219 = vunpack.c.l.b16 %v183
      %v220 = vpack.c.b16 %v205, %v204
      %v221 = vpack.c.b16 %v207, %v206
      %v222 = vpack.c.b16 %v209, %v208
      %v223 = vpack.c.b16 %v211, %v210
      %v224 = vpack.c.b16 %v213, %v212
      %v225 = vpack.c.b16 %v215, %v214
      %v226 = vpack.c.b16 %v217, %v216
      %v227 = vpack.c.b16 %v219, %v218
      %236 = vmatprep.subr.bf16.mxu0 0
      %237 = vmatpush1.bf16.msra.mxu0 %v220
      %238 = vmatprep.subr.bf16.mxu0 0
      %239 = vmatpush1.bf16.msra.mxu0 %v221
      %240 = vmatprep.subr.bf16.mxu0 0
      %241 = vmatpush1.bf16.msra.mxu0 %v222
      %242 = vmatprep.subr.bf16.mxu0 0
      %243 = vmatpush1.bf16.msra.mxu0 %v223
      %244 = vmatprep.subr.bf16.mxu0 0
      %245 = vmatpush1.bf16.msra.mxu0 %v224
      %246 = vmatprep.subr.bf16.mxu0 0
      %247 = vmatpush1.bf16.msra.mxu0 %v225
      %248 = vmatprep.subr.bf16.mxu0 0
      %249 = vmatpush1.bf16.msra.mxu0 %v226
      %250 = vmatprep.subr.bf16.mxu0 0
      %251 = vmatpush1.bf16.msra.mxu0 %v227
      %252 = vmatprep.subr.bf16.mxu0 0
      %253 = vmatpush1.bf16.msra.mxu0 0
      %254 = vmatprep.subr.bf16.mxu0 0
      %255 = vmatpush1.bf16.msra.mxu0 0
      %256 = vmatprep.subr.bf16.mxu0 0
      %257 = vmatpush1.bf16.msra.mxu0 0
      %258 = vmatprep.subr.bf16.mxu0 0
      %259 = vmatpush1.bf16.msra.mxu0 0
      %260 = vmatprep.subr.bf16.mxu0 0
      %261 = vmatpush1.bf16.msra.mxu0 0
      %262 = vmatprep.subr.bf16.mxu0 0
      %263 = vmatpush1.bf16.msra.mxu0 0
      %264 = vmatprep.subr.bf16.mxu0 0
      %265 = vmatpush1.bf16.msra.mxu0 0
      %266 = vmatprep.subr.bf16.mxu0 0
      %267 = vmatpush1.bf16.msra.mxu0 0
      %268 = vmatprep.mubr.bf16.mxu0 0
      %269 = vmatmul.mubr.bf16.gmra.mrb[0].mxu0 %v167
      %v270 = vpop.f32.mrb[0].mxu0
      %v271 = vadd.f32 %v187, %v270
      %v272 = vpop.f32.mrb[0].mxu0
      %v273 = vpop.f32.mrb[0].mxu0
      %v274 = vadd.f32 %v187, %v273
      %v275 = vpop.f32.mrb[0].mxu0
      %276 = vdwg.mxu0
      %277 = vadd.xlane.f32.xlu0 %v271
      %v278 = vpop.xlane.xlu0 %277
      %279 = vadd.xlane.f32.xlu0 %v274
      %v280 = vpop.xlane.xlu0 %279
      %v281 = vmul.f32 %v271, %v271
      %v282 = vmul.f32 %v274, %v274
      %283 = vadd.xlane.f32.xlu0 %v281
      %v284 = vpop.xlane.xlu0 %283
      %285 = vadd.xlane.f32.xlu0 %v282
      %v286 = vpop.xlane.xlu0 %285
      %v287 = vmul.f32 %v278, 0.015625
      %v288 = vmul.f32 %v280, 0.015625
      %v289 = vmul.f32 %v284, 0.015625
      %v290 = vmul.f32 %v286, 0.015625
      %v291 = vmul.f32 %v287, %v287
      %v292 = vmul.f32 %v288, %v288
      %v293 = vsub.f32 %v289, %v291
      %v294 = vsub.f32 %v290, %v292
      %v295 = vmax.f32 %v293, 0.0
      %v296 = vmax.f32 %v294, 0.0
      %v297 = vsub.f32 %v271, %v287
      %v298 = vsub.f32 %v274, %v288
      %v299 = vadd.f32 %v295, 1e-05
      %v300 = vadd.f32 %v296, 1e-05
      %v301 = vrsqrt.pop %v299
      %v302 = vrsqrt.pop %v300
      %v303 = vmul.f32 %v297, %v301
      %v304 = vmul.f32 %v298, %v302
      %v305 = vlaneseq
      %v306 = vshrl.u32 %v305, 7
      %v307 = vsub.s32 1, %v306
      %v308 = vrot.slane %v165, %v307
      %v309 = vmul.f32 %v303, %v308
      %v310 = vmul.f32 %v304, %v308
      %v311 = vlaneseq
      %v312 = vshrl.u32 %v311, 7
      %v313 = vsub.s32 2, %v312
      %v314 = vrot.slane %v165, %v313
      %v315 = vadd.f32 %v309, %v314
      %v316 = vadd.f32 %v310, %v314
      %v317 = vmax.f32 %v315, 0.0
      %v318 = vmax.f32 %v316, 0.0
      %v319 = vpack.c.bf16 %v318, %v317
      %v320 = vld [vmem:[%s4] sm:$0xf]
      %v321 = vld [vmem:[%s4 + $0x4] sm:$0xf]
      %v322 = vld [vmem:[%s4 + $0x8] sm:$0xf]
      %v323 = vld [vmem:[%s4 + $0xc] sm:$0xf]
      %v324 = vld [vmem:[%s4 + $0x10] sm:$0xf]
      %v325 = vld [vmem:[%s4 + $0x14] sm:$0xf]
      %v326 = vld [vmem:[%s4 + $0x18] sm:$0xf]
      %v327 = vld [vmem:[%s4 + $0x1c] sm:$0xf]
      %v328 = vld [vmem:[%s4 + $0x20] sm:$0xf]
      %v329 = vld [vmem:[%s4 + $0x24] sm:$0xf]
      %v330 = vld [vmem:[%s4 + $0x28] sm:$0xf]
      %v331 = vld [vmem:[%s4 + $0x2c] sm:$0xf]
      %v332 = vld [vmem:[%s4 + $0x30] sm:$0xf]
      %v333 = vld [vmem:[%s4 + $0x34] sm:$0xf]
      %v334 = vld [vmem:[%s4 + $0x38] sm:$0xf]
      %v335 = vld [vmem:[%s4 + $0x3c] sm:$0xf]
      %v336 = vlaneseq
      %v337 = vshrl.u32 %v336, 7
      %v338 = vsub.s32 0, %v337
      %v339 = vrot.slane %v166, %v338
      %v356 = vunpack.c.l.b16 %v320
      %v357 = vunpack.c.l.b16 %v321
      %v358 = vunpack.c.l.b16 %v322
      %v359 = vunpack.c.l.b16 %v323
      %v360 = vunpack.c.l.b16 %v324
      %v361 = vunpack.c.l.b16 %v325
      %v362 = vunpack.c.l.b16 %v326
      %v363 = vunpack.c.l.b16 %v327
      %v364 = vunpack.c.l.b16 %v328
      %v365 = vunpack.c.l.b16 %v329
      %v366 = vunpack.c.l.b16 %v330
      %v367 = vunpack.c.l.b16 %v331
      %v368 = vunpack.c.l.b16 %v332
      %v369 = vunpack.c.l.b16 %v333
      %v370 = vunpack.c.l.b16 %v334
      %v371 = vunpack.c.l.b16 %v335
      %v372 = vpack.c.b16 %v357, %v356
      %v373 = vpack.c.b16 %v359, %v358
      %v374 = vpack.c.b16 %v361, %v360
      %v375 = vpack.c.b16 %v363, %v362
      %v376 = vpack.c.b16 %v365, %v364
      %v377 = vpack.c.b16 %v367, %v366
      %v378 = vpack.c.b16 %v369, %v368
      %v379 = vpack.c.b16 %v371, %v370
      %388 = vmatprep.subr.bf16.mxu0 0
      %389 = vmatpush1.bf16.msra.mxu0 %v372
      %390 = vmatprep.subr.bf16.mxu0 0
      %391 = vmatpush1.bf16.msra.mxu0 %v373
      %392 = vmatprep.subr.bf16.mxu0 0
      %393 = vmatpush1.bf16.msra.mxu0 %v374
      %394 = vmatprep.subr.bf16.mxu0 0
      %395 = vmatpush1.bf16.msra.mxu0 %v375
      %396 = vmatprep.subr.bf16.mxu0 0
      %397 = vmatpush1.bf16.msra.mxu0 %v376
      %398 = vmatprep.subr.bf16.mxu0 0
      %399 = vmatpush1.bf16.msra.mxu0 %v377
      %400 = vmatprep.subr.bf16.mxu0 0
      %401 = vmatpush1.bf16.msra.mxu0 %v378
      %402 = vmatprep.subr.bf16.mxu0 0
      %403 = vmatpush1.bf16.msra.mxu0 %v379
      %404 = vmatprep.subr.bf16.mxu0 0
      %405 = vmatpush1.bf16.msra.mxu0 0
      %406 = vmatprep.subr.bf16.mxu0 0
      %407 = vmatpush1.bf16.msra.mxu0 0
      %408 = vmatprep.subr.bf16.mxu0 0
      %409 = vmatpush1.bf16.msra.mxu0 0
      %410 = vmatprep.subr.bf16.mxu0 0
      %411 = vmatpush1.bf16.msra.mxu0 0
      %412 = vmatprep.subr.bf16.mxu0 0
      %413 = vmatpush1.bf16.msra.mxu0 0
      %414 = vmatprep.subr.bf16.mxu0 0
      %415 = vmatpush1.bf16.msra.mxu0 0
      %416 = vmatprep.subr.bf16.mxu0 0
      %417 = vmatpush1.bf16.msra.mxu0 0
      %418 = vmatprep.subr.bf16.mxu0 0
      %419 = vmatpush1.bf16.msra.mxu0 0
      %420 = vmatprep.mubr.bf16.mxu0 0
      %421 = vmatmul.mubr.bf16.gmra.mrb[0].mxu0 %v319
      %v422 = vpop.f32.mrb[0].mxu0
      %v423 = vadd.f32 %v339, %v422
      %v424 = vpop.f32.mrb[0].mxu0
      %v425 = vpop.f32.mrb[0].mxu0
      %v426 = vadd.f32 %v339, %v425
      %v427 = vpop.f32.mrb[0].mxu0
      %428 = vdwg.mxu0
      %429 = vadd.xlane.f32.xlu0 %v423
      %v430 = vpop.xlane.xlu0 %429
      %431 = vadd.xlane.f32.xlu0 %v426
      %v432 = vpop.xlane.xlu0 %431
      %v433 = vmul.f32 %v423, %v423
      %v434 = vmul.f32 %v426, %v426
      %435 = vadd.xlane.f32.xlu0 %v433
      %v436 = vpop.xlane.xlu0 %435
      %437 = vadd.xlane.f32.xlu0 %v434
      %v438 = vpop.xlane.xlu0 %437
      %v439 = vmul.f32 %v430, 0.03125
      %v440 = vmul.f32 %v432, 0.03125
      %v441 = vmul.f32 %v436, 0.03125
      %v442 = vmul.f32 %v438, 0.03125
      %v443 = vmul.f32 %v439, %v439
      %v444 = vmul.f32 %v440, %v440
      %v445 = vsub.f32 %v441, %v443
      %v446 = vsub.f32 %v442, %v444
      %v447 = vmax.f32 %v445, 0.0
      %v448 = vmax.f32 %v446, 0.0
      %v449 = vsub.f32 %v423, %v439
      %v450 = vsub.f32 %v426, %v440
      %v451 = vadd.f32 %v447, 1e-05
      %v452 = vadd.f32 %v448, 1e-05
      %v453 = vrsqrt.pop %v451
      %v454 = vrsqrt.pop %v452
      %v455 = vmul.f32 %v449, %v453
      %v456 = vmul.f32 %v450, %v454
      %v457 = vlaneseq
      %v458 = vshrl.u32 %v457, 7
      %v459 = vsub.s32 1, %v458
      %v460 = vrot.slane %v166, %v459
      %v461 = vmul.f32 %v455, %v460
      %v462 = vmul.f32 %v456, %v460
      %v463 = vlaneseq
      %v464 = vshrl.u32 %v463, 7
      %v465 = vsub.s32 2, %v464
      %v466 = vrot.slane %v166, %v465
      %v467 = vadd.f32 %v461, %v466
      %v468 = vadd.f32 %v462, %v466
      %v469 = vpack.c.bf16 %v468, %v467
      %v470 = vpack.c.bf16 %v160, %v159
      %v471 = vld [vmem:[%s5] sm:$0xf]
      %v472 = vld [vmem:[%s5 + $0x4] sm:$0xf]
      %v473 = vld [vmem:[%s5 + $0x8] sm:$0xf]
      %v474 = vld [vmem:[%s5 + $0xc] sm:$0xf]
      %v475 = vld [vmem:[%s5 + $0x10] sm:$0xf]
      %v476 = vld [vmem:[%s5 + $0x14] sm:$0xf]
      %v477 = vld [vmem:[%s5 + $0x18] sm:$0xf]
      %v478 = vld [vmem:[%s5 + $0x1c] sm:$0xf]
      %v479 = vld [vmem:[%s5 + $0x20] sm:$0xf]
      %v480 = vld [vmem:[%s5 + $0x24] sm:$0xf]
      %v481 = vld [vmem:[%s5 + $0x28] sm:$0xf]
      %v482 = vld [vmem:[%s5 + $0x2c] sm:$0xf]
      %v483 = vld [vmem:[%s5 + $0x30] sm:$0xf]
      %v484 = vld [vmem:[%s5 + $0x34] sm:$0xf]
      %v485 = vld [vmem:[%s5 + $0x38] sm:$0xf]
      %v486 = vld [vmem:[%s5 + $0x3c] sm:$0xf]
      %v487 = vld [vmem:[%s5 + $0x40] sm:$0xf]
      %v488 = vld [vmem:[%s5 + $0x44] sm:$0xf]
      %v489 = vld [vmem:[%s5 + $0x48] sm:$0xf]
      %v490 = vld [vmem:[%s5 + $0x4c] sm:$0xf]
      %v491 = vld [vmem:[%s5 + $0x50] sm:$0xf]
      %v492 = vld [vmem:[%s5 + $0x54] sm:$0xf]
      %v493 = vld [vmem:[%s5 + $0x58] sm:$0xf]
      %v494 = vld [vmem:[%s5 + $0x5c] sm:$0xf]
      %v495 = vld [vmem:[%s5 + $0x60] sm:$0xf]
      %v496 = vld [vmem:[%s5 + $0x64] sm:$0xf]
      %v497 = vld [vmem:[%s5 + $0x68] sm:$0xf]
      %v498 = vld [vmem:[%s5 + $0x6c] sm:$0xf]
      %v499 = vld [vmem:[%s5 + $0x70] sm:$0xf]
      %v500 = vld [vmem:[%s5 + $0x74] sm:$0xf]
      %v501 = vld [vmem:[%s5 + $0x78] sm:$0xf]
      %v502 = vld [vmem:[%s5 + $0x7c] sm:$0xf]
      %v503 = vlaneseq
      %v504 = vshrl.u32 %v503, 7
      %v505 = vsub.s32 3, %v504
      %v506 = vrot.slane %v166, %v505
      %v539 = vunpack.c.l.b16 %v471
      %v540 = vunpack.c.l.b16 %v472
      %v541 = vunpack.c.l.b16 %v473
      %v542 = vunpack.c.l.b16 %v474
      %v543 = vunpack.c.l.b16 %v475
      %v544 = vunpack.c.l.b16 %v476
      %v545 = vunpack.c.l.b16 %v477
      %v546 = vunpack.c.l.b16 %v478
      %v547 = vunpack.c.l.b16 %v479
      %v548 = vunpack.c.l.b16 %v480
      %v549 = vunpack.c.l.b16 %v481
      %v550 = vunpack.c.l.b16 %v482
      %v551 = vunpack.c.l.b16 %v483
      %v552 = vunpack.c.l.b16 %v484
      %v553 = vunpack.c.l.b16 %v485
      %v554 = vunpack.c.l.b16 %v486
      %v555 = vunpack.c.l.b16 %v487
      %v556 = vunpack.c.l.b16 %v488
      %v557 = vunpack.c.l.b16 %v489
      %v558 = vunpack.c.l.b16 %v490
      %v559 = vunpack.c.l.b16 %v491
      %v560 = vunpack.c.l.b16 %v492
      %v561 = vunpack.c.l.b16 %v493
      %v562 = vunpack.c.l.b16 %v494
      %v563 = vunpack.c.l.b16 %v495
      %v564 = vunpack.c.l.b16 %v496
      %v565 = vunpack.c.l.b16 %v497
      %v566 = vunpack.c.l.b16 %v498
      %v567 = vunpack.c.l.b16 %v499
      %v568 = vunpack.c.l.b16 %v500
      %v569 = vunpack.c.l.b16 %v501
      %v570 = vunpack.c.l.b16 %v502
      %v571 = vpack.c.b16 %v540, %v539
      %v572 = vpack.c.b16 %v542, %v541
      %v573 = vpack.c.b16 %v544, %v543
      %v574 = vpack.c.b16 %v546, %v545
      %v575 = vpack.c.b16 %v548, %v547
      %v576 = vpack.c.b16 %v550, %v549
      %v577 = vpack.c.b16 %v552, %v551
      %v578 = vpack.c.b16 %v554, %v553
      %v579 = vpack.c.b16 %v556, %v555
      %v580 = vpack.c.b16 %v558, %v557
      %v581 = vpack.c.b16 %v560, %v559
      %v582 = vpack.c.b16 %v562, %v561
      %v583 = vpack.c.b16 %v564, %v563
      %v584 = vpack.c.b16 %v566, %v565
      %v585 = vpack.c.b16 %v568, %v567
      %v586 = vpack.c.b16 %v570, %v569
      %603 = vmatprep.subr.bf16.mxu0 0
      %604 = vmatpush1.bf16.msra.mxu0 %v571
      %605 = vmatprep.subr.bf16.mxu0 0
      %606 = vmatpush1.bf16.msra.mxu0 %v572
      %607 = vmatprep.subr.bf16.mxu0 0
      %608 = vmatpush1.bf16.msra.mxu0 %v573
      %609 = vmatprep.subr.bf16.mxu0 0
      %610 = vmatpush1.bf16.msra.mxu0 %v574
      %611 = vmatprep.subr.bf16.mxu0 0
      %612 = vmatpush1.bf16.msra.mxu0 %v575
      %613 = vmatprep.subr.bf16.mxu0 0
      %614 = vmatpush1.bf16.msra.mxu0 %v576
      %615 = vmatprep.subr.bf16.mxu0 0
      %616 = vmatpush1.bf16.msra.mxu0 %v577
      %617 = vmatprep.subr.bf16.mxu0 0
      %618 = vmatpush1.bf16.msra.mxu0 %v578
      %619 = vmatprep.subr.bf16.mxu0 0
      %620 = vmatpush1.bf16.msra.mxu0 %v579
      %621 = vmatprep.subr.bf16.mxu0 0
      %622 = vmatpush1.bf16.msra.mxu0 %v580
      %623 = vmatprep.subr.bf16.mxu0 0
      %624 = vmatpush1.bf16.msra.mxu0 %v581
      %625 = vmatprep.subr.bf16.mxu0 0
      %626 = vmatpush1.bf16.msra.mxu0 %v582
      %627 = vmatprep.subr.bf16.mxu0 0
      %628 = vmatpush1.bf16.msra.mxu0 %v583
      %629 = vmatprep.subr.bf16.mxu0 0
      %630 = vmatpush1.bf16.msra.mxu0 %v584
      %631 = vmatprep.subr.bf16.mxu0 0
      %632 = vmatpush1.bf16.msra.mxu0 %v585
      %633 = vmatprep.subr.bf16.mxu0 0
      %634 = vmatpush1.bf16.msra.mxu0 %v586
      %635 = vmatprep.mubr.bf16.mxu0 %v470
      %636 = vmatmul.mubr.bf16.gmra.mrb[0].mxu0 %v469
      %v637 = vpop.f32.mrb[0].mxu0
      %v638 = vadd.f32 %v506, %v637
      %v639 = vpop.f32.mrb[0].mxu0
      %v640 = vpop.f32.mrb[0].mxu0
      %v641 = vadd.f32 %v506, %v640
      %v642 = vpop.f32.mrb[0].mxu0
      %643 = vdwg.mxu0
      %v644 = vxor.u32 %v638, 2147483648
      %v645 = vxor.u32 %v641, 2147483648
      %v646 = vmul.f32 %v644, 1.442695
      %v647 = vpow.pop %v646
      %v648 = vmul.f32 %v645, 1.442695
      %v649 = vpow.pop %v648
      %v650 = vadd.f32 %v647, 1.0
      %v651 = vadd.f32 %v649, 1.0
      %v652 = vrcp.pop %v650
      %v653 = vmul.f32 1.0, %v652
      %v654 = vrcp.pop %v651
      %v655 = vmul.f32 1.0, %v654
      %v656 = vmul.f32 %v653, %v467
      %v657 = vmul.f32 %v655, %v468
      %v658 = vsub.f32 1.0, %v653
      %v659 = vsub.f32 1.0, %v655
      %v660 = vmul.f32 %v658, %v159
      %v661 = vmul.f32 %v659, %v160
      %v662 = vadd.f32 %v656, %v660
      %v663 = vadd.f32 %v657, %v661
      %664 = vadd.xlane.f32.xlu0 %v662
      %v665 = vpop.xlane.xlu0 %664
      %666 = vadd.xlane.f32.xlu0 %v663
      %v667 = vpop.xlane.xlu0 %666
      %v668 = vmul.f32 %v662, %v662
      %v669 = vmul.f32 %v663, %v663
      %670 = vadd.xlane.f32.xlu0 %v668
      %v671 = vpop.xlane.xlu0 %670
      %672 = vadd.xlane.f32.xlu0 %v669
      %v673 = vpop.xlane.xlu0 %672
      %v674 = vmul.f32 %v665, 0.03125
      %v675 = vmul.f32 %v667, 0.03125
      %v676 = vmul.f32 %v671, 0.03125
      %v677 = vmul.f32 %v673, 0.03125
      %v678 = vmul.f32 %v674, %v674
      %v679 = vmul.f32 %v675, %v675
      %v680 = vsub.f32 %v676, %v678
      %v681 = vsub.f32 %v677, %v679
      %v682 = vmax.f32 %v680, 0.0
      %v683 = vmax.f32 %v681, 0.0
      %v684 = vsub.f32 %v662, %v674
      %v685 = vsub.f32 %v663, %v675
      %v686 = vadd.f32 %v682, 1e-05
      %v687 = vadd.f32 %v683, 1e-05
      %v688 = vrsqrt.pop %v686
      %v689 = vrsqrt.pop %v687
      %v690 = vmul.f32 %v684, %v688
      %v691 = vmul.f32 %v685, %v689
      %v692 = vlaneseq
      %v693 = vshrl.u32 %v692, 7
      %v694 = vsub.s32 4, %v693
      %v695 = vrot.slane %v166, %v694
      %v696 = vmul.f32 %v690, %v695
      %v697 = vmul.f32 %v691, %v695
      %v698 = vlaneseq
      %v699 = vshrl.u32 %v698, 7
      %v700 = vsub.s32 5, %v699
      %v701 = vrot.slane %v166, %v700
      %v702 = vadd.f32 %v696, %v701
      %v703 = vadd.f32 %v697, %v701
      %v704 = vmax.f32 %v702, 0.0
      %v705 = vmax.f32 %v703, 0.0
      %706 = vst [vmem:[#allocation3] sm:$0xff] %v704
      %707 = vst [vmem:[#allocation3 + $0x8] sm:$0xff] %v705
    $region41: #{geognn_block.1} parent=1 // pred_fallthru
      _
    // Predicated region
    $region42: #{geognn_block.1} parent=1 // pred_check
      _
    $region43: #{geognn_block.1} parent=1 // pred_check_branch
      %709 = sbr.rel (0) target = $region45
    $region44: #{geognn_block.1} parent=1 // pred_region
      %s711 = ssub.s32 256, 256
      %712 = vsyncadd [#allocation4], %s711
      %s713 = sshll.u32 [#allocation3], 4
      %s714 = int_to_ptr.vmem [resolvable:$true] %s713
      %719 = dma.vmem_to_hbm [thread:$0]  %s714, 256, %s8, [#allocation4], 128, 128, 8
    $region45: #{geognn_block.1} parent=1 // pred_fallthru
      _
    // Predicated region
    $region46: #{geognn_block.1} parent=1 // pred_check
      _
    $region47: #{geognn_block.1} parent=1 // pred_check_branch
      %721 = sbr.rel (0) target = $region49
    $region48: #{geognn_block.1} parent=1 // pred_region
      %722 = dma.done [#allocation4], 256
    $region49: #{geognn_block.1} parent=1 // pred_fallthru
      _
    %723 = vsyncpa [#allocation4], 1

</llo_original>
